<compile_context>
chip_gen: v7x
topology: tpu7x:2x2x1
jax: 0.10.0
libtpu: 0.0.40
codegen_flags: <defaults>
</compile_context>

<pallas_src>
import functools

import jax
import jax.numpy as jnp
from jax.experimental import pallas as pl
from jax.experimental.pallas import tpu as pltpu


def _is_pow2(n):
    return n > 0 and (n & (n - 1)) == 0


def _mod_const(v, n):
    # v % n for an int32 vector and a static positive int (pow2 fast path).
    return (v & (n - 1)) if _is_pow2(n) else (v % n)


def _div_const(v, n):
    # v // n for an int32 vector and a static positive int (pow2 fast path).
    return (v >> (n.bit_length() - 1)) if _is_pow2(n) else (v // n)


def _choose_row_block(NC, Z, YX, itemsize, target_bytes=2 << 20):
    """Pick the row-block size RB = TB * Z with TB dividing N*C.

    Constraints:
      * RB divides N*C*Z (so the grid is exact) and is a multiple of Z (so an
        (n, c) volume never straddles two blocks).
      * RB % 8 == 0 or RB == full extent (TPU block-shape legality).
    Preferences: block bytes <= target (keeps double-buffered in+out small
    enough for every chip generation), and grid length >= 2 (v7x megacore).
    """
    R = NC * Z
    cands = []
    for tb in range(1, NC + 1):
        if NC % tb:
            continue
        rb = tb * Z
        if rb % 8 != 0 and rb != R:
            continue
        cands.append(rb)
    bytes_of = lambda rb: rb * YX * itemsize
    fitting = [rb for rb in cands if bytes_of(rb) <= target_bytes]
    pool = fitting if fitting else [min(cands, key=bytes_of)]
    ge2 = [rb for rb in pool if R // rb >= 2]
    return max(ge2 if ge2 else pool)


def make_shift3d(shift, shape, dtype):
    """Build a callable implementing Shift3d(shift) for fixed (N,C,Z,Y,X) input."""
    x_shift, y_shift, z_shift = (int(s) for s in shift)
    N, C, Z, Y, X = shape
    NC = N * C
    R = NC * Z          # rows of the flattened 2-D slab
    YX = Y * X          # lane axis
    itemsize = jnp.dtype(dtype).itemsize

    RB = _choose_row_block(NC, Z, YX, itemsize)
    grid = (R // RB,)

    # Roll amounts (non-negative, modulo the actual rolled-axis length).
    row_roll = z_shift % RB                    # Z shift on the sublane/row axis
    lane_roll = (y_shift * X + x_shift) % YX   # combined Y/X shift on the lane axis

    def shift_kernel(x_ref, o_ref):
        v = x_ref[...]                         # (RB, YX) tile, one full load
        if row_roll:
            # Z shift: sublane roll (slices+concat); wrapped rows are masked below.
            v = jnp.roll(v, row_roll, axis=0)
        if lane_roll:
            # Combined Y/X shift: single lane rotation on the XLU.
            v = pltpu.roll(v, lane_roll, axis=1)

        # Zero the boundaries that the rolls wrapped around, with one mask.
        conds = []
        if z_shift != 0:
            rows = jax.lax.broadcasted_iota(jnp.int32, (RB, YX), 0)
            zi = _mod_const(rows, Z)           # z coordinate of each row
            conds.append(zi >= z_shift if z_shift > 0 else zi < Z + z_shift)
        if y_shift != 0 or x_shift != 0:
            lanes = jax.lax.broadcasted_iota(jnp.int32, (RB, YX), 1)
            if y_shift != 0:
                yi = _div_const(lanes, X)      # y coordinate
                conds.append(yi >= y_shift if y_shift > 0 else yi < Y + y_shift)
            if x_shift != 0:
                xi = _mod_const(lanes, X)      # x coordinate
                conds.append(xi >= x_shift if x_shift > 0 else xi < X + x_shift)

        if conds:
            valid = functools.reduce(jnp.logical_and, conds)
            v = jnp.where(valid, v, jnp.zeros_like(v))

        o_ref[...] = v                         # single unmasked full-width store

    shifted_call = pl.pallas_call(
        shift_kernel,
        out_shape=jax.ShapeDtypeStruct((R, YX), dtype),
        grid=grid,
        in_specs=[pl.BlockSpec((RB, YX), lambda i: (i, 0))],
        out_specs=pl.BlockSpec((RB, YX), lambda i: (i, 0)),
        compiler_params=pltpu.CompilerParams(
            dimension_semantics=("parallel",),
        ),
    )

    def shift3d(x):
        assert x.shape == (N, C, Z, Y, X), x.shape
        out = shifted_call(x.reshape(R, YX))   # contiguous reshape: free
        return out.reshape(N, C, Z, Y, X)

    return shift3d


def shift3d_reference(x, shift):
    """Pure-JAX reference mirroring the PyTorch pad-then-crop composition."""
    x_shift, y_shift, z_shift = shift
    z_a, z_b = (abs(z_shift), 0)
    y_a, y_b = (abs(y_shift), 0)
    x_a, x_b = (abs(x_shift), 0)
    if z_shift < 0:
        z_a, z_b = z_b, z_a
    if y_shift < 0:
        y_a, y_b = y_b, y_a
    if x_shift < 0:
        x_a, x_b = x_b, x_a
    padded = jnp.pad(
        x, ((0, 0), (0, 0), (z_a, z_b), (y_a, y_b), (x_a, x_b))
    )
    # Crop3d((x_b, x_a, y_b, y_a, z_b, z_a))
    Zp, Yp, Xp = padded.shape[-3:]
    return padded[:, :, z_b:Zp - z_a, y_b:Yp - y_a, x_b:Xp - x_a]


if __name__ == "__main__":
    # Small deterministic example, 5-D (N, C, Z, Y, X) input.
    N, C, Z, Y, X = 2, 4, 8, 16, 16
    shift = (1, -2, 1)  # (x_shift, y_shift, z_shift), as in Shift3d.__init__

    key = jax.random.PRNGKey(0)
    x = jax.random.normal(key, (N, C, Z, Y, X), dtype=jnp.float32)

    shift3d = make_shift3d(shift, (N, C, Z, Y, X), jnp.float32)
    out = jax.block_until_ready(shift3d(x))

    ref = shift3d_reference(x, shift)
    assert out.shape == ref.shape, (out.shape, ref.shape)
    assert jnp.array_equal(out, ref), "mismatch vs reference"

    print("KERNEL_OK")
</pallas_src>

<mosaic_0001>
module attributes {stable_mosaic.version = 11 : i64} {
  func.func @shift_kernel(%arg0: i32, %arg1: memref<32x256xf32, #tpu.memory_space<vmem>>, %arg2: memref<32x256xf32, #tpu.memory_space<vmem>>) attributes {dimension_semantics = [#tpu.dimension_semantics<parallel>], iteration_bounds = array<i64: 2>, scalar_prefetch = 0 : i64, scratch_operands = 0 : i64, tpu.core_type = #tpu.core_type<tc>, window_params = [{transform_indices = @transform_0, window_bounds = array<i64: 32, 256>}, {transform_indices = @transform_1, window_bounds = array<i64: 32, 256>}]} {
    %c0 = arith.constant 0 : index
    %c0_0 = arith.constant 0 : index
    %0 = vector.load %arg1[%c0, %c0_0] : memref<32x256xf32, #tpu.memory_space<vmem>>, vector<32x256xf32>
    %1 = vector.extract_strided_slice %0 {offsets = [31, 0], sizes = [1, 256], strides = [1, 1]} : vector<32x256xf32> to vector<1x256xf32>
    %2 = vector.extract_strided_slice %0 {offsets = [0, 0], sizes = [31, 256], strides = [1, 1]} : vector<32x256xf32> to vector<31x256xf32>
    %3 = tpu.concatenate %1, %2 in 0 : vector<1x256xf32>, vector<31x256xf32> -> vector<32x256xf32>
    %c225_i32 = arith.constant 225 : i32
    %4 = tpu.dynamic_rotate %3 by %c225_i32 dim 1 : vector<32x256xf32>, i32 -> vector<32x256xf32>
    %5 = tpu.iota {dimensions = array<i32: 0>} : vector<32x256xi32>
    %c7_i32 = arith.constant 7 : i32
    %6 = vector.broadcast %c7_i32 : i32 to vector<32x256xi32>
    %7 = arith.andi %5, %6 : vector<32x256xi32>
    %c1_i32 = arith.constant 1 : i32
    %8 = vector.broadcast %c1_i32 : i32 to vector<32x256xi32>
    %9 = arith.cmpi sge, %7, %8 : vector<32x256xi32>
    %10 = tpu.iota {dimensions = array<i32: 1>} : vector<32x256xi32>
    %c4_i32 = arith.constant 4 : i32
    %11 = vector.broadcast %c4_i32 : i32 to vector<32x256xi32>
    %12 = arith.shrsi %10, %11 : vector<32x256xi32>
    %c14_i32 = arith.constant 14 : i32
    %13 = vector.broadcast %c14_i32 : i32 to vector<32x256xi32>
    %14 = arith.cmpi slt, %12, %13 : vector<32x256xi32>
    %c15_i32 = arith.constant 15 : i32
    %15 = vector.broadcast %c15_i32 : i32 to vector<32x256xi32>
    %16 = arith.andi %10, %15 : vector<32x256xi32>
    %c1_i32_1 = arith.constant 1 : i32
    %17 = vector.broadcast %c1_i32_1 : i32 to vector<32x256xi32>
    %18 = arith.cmpi sge, %16, %17 : vector<32x256xi32>
    %19 = arith.andi %9, %14 : vector<32x256xi1>
    %20 = arith.andi %19, %18 : vector<32x256xi1>
    %cst = arith.constant 0.000000e+00 : f32
    %21 = vector.broadcast %cst : f32 to vector<32x256xf32>
    %22 = arith.select %20, %4, %21 : vector<32x256xi1>, vector<32x256xf32>
    %c0_2 = arith.constant 0 : index
    %c0_3 = arith.constant 0 : index
    %23 = vector.load %arg2[%c0_2, %c0_3] : memref<32x256xf32, #tpu.memory_space<vmem>>, vector<32x256xf32>
    tpu.vector_store %arg2[%c0_2, %c0_3], %22 {strides = array<i32>} : memref<32x256xf32, #tpu.memory_space<vmem>>, vector<32x256xf32>,
    return
  }
  func.func @transform_0(%arg0: i32) -> (i32, i32) {
    %c0_i32 = arith.constant 0 : i32
    %c0_i32_0 = arith.constant 0 : i32
    return %arg0, %c0_i32 : i32, i32
  }
  func.func @transform_1(%arg0: i32) -> (i32, i32) {
    %c0_i32 = arith.constant 0 : i32
    %c0_i32_0 = arith.constant 0 : i32
    return %arg0, %c0_i32 : i32, i32
  }
}

</mosaic_0001>

<llo_original>
// kernel: tpu_custom_call.1
$region0: #{tpu_custom_call.1}
  #allocation0 [shape = 'u32[]', space=smem, size = 0x4, offset = 0x4, fixed_abs, tag = 'smem constant byte address 0x4 - core index']
  #allocation1 [shape = 'u32[144,128]{1,0:T(1,128)}', space=vmem, size = 0x12000, scoped, tag = 'internal scratch']
  %s0 = inlined_call_operand.hbm [shape: f32[64,256], index: 0, kind: input, shape index: {}]
  %s1 = inlined_call_operand.hbm [shape: f32[64,256], index: 1, kind: output, shape index: {}]
  %s2 = sld [smem:[#allocation0]]
  $region41: #{tpu_custom_call.1} parent=0
    _
  %s4 = ssub.s32 1, %s2
  %s5 = scalar_select 0, %s4, %s2
  $region1: #{tpu_custom_call.1} parent=0
    #allocation2 [shape = 'u8[65536]{0}', space=vmem, size = 0x10000, scoped, tag = 'input window, operand 0']
    #allocation3 [shape = 's32[2]{0}', space=sflag, size = 0x8, scoped, tag = 'scoped memory for tpu_custom_call.1']
    #allocation4 [shape = 's32[2]{0}', space=sflag, size = 0x8, scoped, tag = 'scoped memory for tpu_custom_call.1']
    #allocation5 [shape = 'u8[65536]{0}', space=vmem, size = 0x10000, scoped, tag = 'output window, operand 0']
    %6 = vsyncpa [#allocation3], 0
    %s7 = scalar_lea.sflag [#allocation3], 1
    %8 = vsyncpa %s7, 0
    %9 = vsyncpa [#allocation4], 0
    %s10 = scalar_lea.sflag [#allocation4], 1
    %11 = vsyncpa %s10, 0
    loop: start=0, step=1, limit=4
    $region2: #{tpu_custom_call.1} parent=1 // loop_pre_header
      _
    $region3: #{tpu_custom_call.1} parent=1 // loop_header
      %s13 = sphi 0, %s17
      %p14 = scmp.ge.s32.totalorder %s13, 4
      %s23 = sphi 0, %s25
      %s26 = sphi 0, %s23
      %s27 = sphi 0, %s26
      %s43 = sphi 0, %s27
      %s49 = sphi 0, %s51
      %s52 = sphi 0, %s49
      %s53 = sphi 0, %s52
      %s69 = sphi 0, %s53
    $region4: #{tpu_custom_call.1} parent=1 // loop_header_branch
      %16 = sbr.rel (%p14) target = $region8
    $region5: #{tpu_custom_call.1} parent=1 // loop_body
      %s18 = ssub.s32 %s13, 1
      %s19 = ssub.s32 %s13, 2
      %s20 = sadd.s32 %s13, 1
      %s21 = ssub.s32 %s13, %s20
      %p22 = scmp.eq.s32.totalorder %s21, 0
      %s24 = sadd.s32 %s23, 1
      %s25 = scalar_select %p22, %s23, %s24
      %p28 = pneg %p22
      %p29 = scmp.eq.s32.totalorder %s13, 1
      %p30 = por %p28, %p29
      %p31 = scmp.ne.s32.totalorder %s23, %s26
      %p32 = scmp.eq.s32.totalorder %s13, 0
      %p33 = por %p31, %p32
      %p34 = scmp.ne.s32.totalorder %s23, %s26
      %p35 = scmp.eq.s32.totalorder %s18, 1
      %p36 = por %p34, %p35
      %p37 = scmp.ne.s32.totalorder %s26, %s27
      %p38 = scmp.eq.s32.totalorder %s18, 0
      %p39 = por %p37, %p38
      %p40 = scmp.ne.s32.totalorder %s26, %s27
      %p41 = scmp.eq.s32.totalorder %s19, 1
      %p42 = por %p40, %p41
      %p44 = scmp.ne.s32.totalorder %s27, %s43
      %p45 = scmp.eq.s32.totalorder %s19, 0
      %p46 = por %p44, %p45
      %s47 = ssub.s32 %s13, %s20
      %p48 = scmp.eq.s32.totalorder %s47, 0
      %s50 = sadd.s32 %s49, 1
      %s51 = scalar_select %p48, %s49, %s50
      %p54 = pneg %p48
      %p55 = scmp.eq.s32.totalorder %s13, 1
      %p56 = por %p54, %p55
      %p57 = scmp.ne.s32.totalorder %s49, %s52
      %p58 = scmp.eq.s32.totalorder %s13, 0
      %p59 = por %p57, %p58
      %p60 = scmp.ne.s32.totalorder %s49, %s52
      %p61 = scmp.eq.s32.totalorder %s18, 1
      %p62 = por %p60, %p61
      %p63 = scmp.ne.s32.totalorder %s52, %s53
      %p64 = scmp.eq.s32.totalorder %s18, 0
      %p65 = por %p63, %p64
      %p66 = scmp.ne.s32.totalorder %s52, %s53
      %p67 = scmp.eq.s32.totalorder %s19, 1
      %p68 = por %p66, %p67
      %p70 = scmp.ne.s32.totalorder %s53, %s69
      %p71 = scmp.eq.s32.totalorder %s19, 0
      %p72 = por %p70, %p71
      %p73 = scmp.le.s32.totalorder 1, %s13
      %p74 = scmp.lt.s32.totalorder %s13, 3
      %p75 = pnand %p73, %p74
      %p76 = pneg %p75
      // Predicated region
      $region9: #{tpu_custom_call.1} parent=5 // pred_check
        _
      $region10: #{tpu_custom_call.1} parent=5 // pred_check_branch
        %78 = sbr.rel (%p75) target = $region12
      $region11: #{tpu_custom_call.1} parent=5 // pred_region
        %s79 = ssub.s32 %s13, 1
      $region12: #{tpu_custom_call.1} parent=5 // pred_fallthru
        _
      %p80 = scmp.lt.s32.totalorder %s13, 2
      // Predicated region
      $region13: #{tpu_custom_call.1} parent=5 // pred_check
        %p81 = pneg %p80
      $region14: #{tpu_custom_call.1} parent=5 // pred_check_branch
        %83 = sbr.rel (%p81) target = $region16
      $region15: #{tpu_custom_call.1} parent=5 // pred_region
        // Predicated region
        $region17: #{tpu_custom_call.1} parent=15 // pred_check
          %p84 = pneg %p33
        $region18: #{tpu_custom_call.1} parent=15 // pred_check_branch
          %86 = sbr.rel (%p84) target = $region20
        $region19: #{tpu_custom_call.1} parent=15 // pred_region
          %s87 = sand.u32 %s23, 1
          %s88 = scalar_lea.sflag [#allocation3], %s87
          %s89 = sand.u32 %s23, 1
          %s90 = smul.addr %s89, 64
          %s91 = scalar_lea.vmem [#allocation2], %s90
          %s92 = smul.u32 4, %s13
          %s94 = ssub.s32 1024, 1024
          %95 = vsyncadd %s88, %s94
          %s96 = smul.addr %s92, 2
          %s97 = smul.addr %s96, 128
          %s98 = scalar_lea.hbm %s0, %s97
          %s99 = sshll.u32 %s91, 4
          %s100 = int_to_ptr.vmem [resolvable:$true] %s99
          %105 = dma.hbm_to_vmem [thread:$0]  %s98, 1024, %s100, %s88, 256, 256, 16
        $region20: #{tpu_custom_call.1} parent=15 // pred_fallthru
          _
      $region16: #{tpu_custom_call.1} parent=5 // pred_fallthru
        _
      %p106 = scmp.le.s32.totalorder 1, %s13
      %p107 = scmp.lt.s32.totalorder %s13, 3
      %p108 = pnand %p106, %p107
      %p109 = pneg %p108
      // Predicated region
      $region21: #{tpu_custom_call.1} parent=5 // pred_check
        _
      $region22: #{tpu_custom_call.1} parent=5 // pred_check_branch
        %111 = sbr.rel (%p108) target = $region24
      $region23: #{tpu_custom_call.1} parent=5 // pred_region
        %s112 = ssub.s32 %s13, 1
        %s113 = sand.u32 %s26, 1
        %s114 = scalar_lea.sflag [#allocation3], %s113
        %s115 = sand.u32 %s26, 1
        %s116 = smul.addr %s115, 64
        %s117 = scalar_lea.vmem [#allocation2], %s116
        // Predicated region
        $region25: #{tpu_custom_call.1} parent=23 // pred_check
          %p118 = pneg %p39
        $region26: #{tpu_custom_call.1} parent=23 // pred_check_branch
          %120 = sbr.rel (%p118) target = $region28
        $region27: #{tpu_custom_call.1} parent=23 // pred_region
          %121 = dma.done %s114, 1024
        $region28: #{tpu_custom_call.1} parent=23 // pred_fallthru
          _
        %s122 = sand.u32 %s26, 1
        %s123 = scalar_lea.sflag [#allocation3], %s122
        %s124 = sand.u32 %s26, 1
        %s125 = smul.addr %s124, 64
        %s126 = scalar_lea.vmem [#allocation2], %s125
        %p127 = pneg %p39
        %p128 = pneg %p36
        %p129 = pneg %p65
        %p130 = pneg %p62
        %s131 = sand.u32 %s52, 1
        %s132 = scalar_lea.sflag [#allocation4], %s131
        %s133 = sand.u32 %s52, 1
        %s134 = smul.addr %s133, 64
        %s135 = scalar_lea.vmem [#allocation5], %s134
        %s136 = smul.u32 4, %s18
        %s137 = smul.u32 4, %s18
        %v138 = vld [vmem:[%s117] sm:$0xff]
        %v139 = vld [vmem:[%s117 + $0x8] sm:$0xff]
        %v140 = vld [vmem:[%s117 + $0x10] sm:$0xff]
        %v141 = vld [vmem:[%s117 + $0x18] sm:$0xff]
        %v142 = vld [vmem:[%s117 + $0x20] sm:$0xff]
        %v143 = vld [vmem:[%s117 + $0x28] sm:$0xff]
        %v144 = vld [vmem:[%s117 + $0x30] sm:$0xff]
        %v145 = vld [vmem:[%s117 + $0x38] sm:$0xff]
        %v148 = vrot.slane %v144, 7
        %v149 = vrot.slane %v145, 7
        %vm158 = vcmask 1040384
        %v159 = vrot.slane %v138, 7
        %v160 = vrot.slane %v139, 7
        %v161 = vrot.slane %v140, 7
        %v162 = vsel %vm158, %v159, %v161
        %v163 = vrot.slane %v141, 7
        %v164 = vsel %vm158, %v160, %v163
        %v165 = vrot.slane %v142, 7
        %v166 = vsel %vm158, %v161, %v165
        %v167 = vrot.slane %v143, 7
        %v168 = vsel %vm158, %v163, %v167
        %v169 = vsel %vm158, %v165, %v148
        %v170 = vsel %vm158, %v167, %v149
        %v179 = vsel %vm158, %v148, %v159
        %v180 = vsel %vm158, %v149, %v160
        %181 = vrot.lane.b32.xlu0 %v179, 97
        %v182 = vpop.permute.xlu0 %181
        %183 = vrot.lane.b32.xlu0 %v162, 97
        %v184 = vpop.permute.xlu0 %183
        %185 = vrot.lane.b32.xlu0 %v166, 97
        %v186 = vpop.permute.xlu0 %185
        %187 = vrot.lane.b32.xlu0 %v169, 97
        %v188 = vpop.permute.xlu0 %187
        %189 = vrot.lane.b32.xlu0 %v180, 97
        %v190 = vpop.permute.xlu0 %189
        %191 = vrot.lane.b32.xlu0 %v164, 97
        %v192 = vpop.permute.xlu0 %191
        %193 = vrot.lane.b32.xlu0 %v168, 97
        %v194 = vpop.permute.xlu0 %193
        %195 = vrot.lane.b32.xlu0 %v170, 97
        %v196 = vpop.permute.xlu0 %195
        %v197 = vlaneseq
        %v198 = vand.u32 %v197, 127
        %vm199 = vcmp.lt.s32.totalorder %v198, 97
        %v200 = vsel %vm199, %v182, %v190
        %v201 = vsel %vm199, %v184, %v192
        %v202 = vsel %vm199, %v186, %v194
        %v203 = vsel %vm199, %v188, %v196
        %v204 = vsel %vm199, %v190, %v182
        %v205 = vsel %vm199, %v192, %v184
        %v206 = vsel %vm199, %v194, %v186
        %v207 = vsel %vm199, %v196, %v188
        %v208 = vlaneseq
        %v209 = vshrl.u32 %v208, 7
        %v210 = vadd.s32 %v209, 8
        %v211 = vadd.s32 %v209, 16
        %v212 = vadd.s32 %v209, 24
        %v213 = vand.u32 %v209, 7
        %v214 = vand.u32 %v210, 7
        %v215 = vand.u32 %v211, 7
        %v216 = vand.u32 %v212, 7
        %vm217 = vcmp.ge.s32.totalorder %v213, 1
        %vm218 = vcmp.ge.s32.totalorder %v214, 1
        %vm219 = vcmp.ge.s32.totalorder %v215, 1
        %vm220 = vcmp.ge.s32.totalorder %v216, 1
        %v221 = vadd.s32 %v198, 128
        %v222 = vshra.s32 %v198, 4
        %v223 = vshra.s32 %v221, 4
        %vm224 = vcmp.lt.s32.totalorder %v222, 14
        %vm225 = vcmp.lt.s32.totalorder %v223, 14
        %v226 = vand.u32 %v198, 15
        %v227 = vand.u32 %v221, 15
        %vm228 = vcmp.ge.s32.totalorder %v226, 1
        %vm229 = vcmp.ge.s32.totalorder %v227, 1
        %vm230 = vmand %vm217, %vm224
        %vm231 = vmand %vm217, %vm225
        %vm232 = vmand %vm218, %vm224
        %vm233 = vmand %vm218, %vm225
        %vm234 = vmand %vm219, %vm224
        %vm235 = vmand %vm219, %vm225
        %vm236 = vmand %vm220, %vm224
        %vm237 = vmand %vm220, %vm225
        %vm238 = vmand %vm230, %vm228
        %vm239 = vmand %vm231, %vm229
        %vm240 = vmand %vm232, %vm228
        %vm241 = vmand %vm233, %vm229
        %vm242 = vmand %vm234, %vm228
        %vm243 = vmand %vm235, %vm229
        %vm244 = vmand %vm236, %vm228
        %vm245 = vmand %vm237, %vm229
        %v246 = vsel %vm238, %v200, 0.0
        %v247 = vsel %vm239, %v204, 0.0
        %v248 = vsel %vm240, %v201, 0.0
        %v249 = vsel %vm241, %v205, 0.0
        %v250 = vsel %vm242, %v202, 0.0
        %v251 = vsel %vm243, %v206, 0.0
        %v252 = vsel %vm244, %v203, 0.0
        %v253 = vsel %vm245, %v207, 0.0
        %254 = vst [vmem:[%s135] sm:$0xff] %v246
        %255 = vst [vmem:[%s135 + $0x8] sm:$0xff] %v247
        %256 = vst [vmem:[%s135 + $0x10] sm:$0xff] %v248
        %257 = vst [vmem:[%s135 + $0x18] sm:$0xff] %v249
        %258 = vst [vmem:[%s135 + $0x20] sm:$0xff] %v250
        %259 = vst [vmem:[%s135 + $0x28] sm:$0xff] %v251
        %260 = vst [vmem:[%s135 + $0x30] sm:$0xff] %v252
        %261 = vst [vmem:[%s135 + $0x38] sm:$0xff] %v253
        %s262 = sand.u32 %s52, 1
        %s263 = scalar_lea.sflag [#allocation4], %s262
        %s264 = sand.u32 %s52, 1
        %s265 = smul.addr %s264, 64
        %s266 = scalar_lea.vmem [#allocation5], %s265
        // Predicated region
        $region29: #{tpu_custom_call.1} parent=23 // pred_check
          %p267 = pneg %p62
        $region30: #{tpu_custom_call.1} parent=23 // pred_check_branch
          %269 = sbr.rel (%p267) target = $region32
        $region31: #{tpu_custom_call.1} parent=23 // pred_region
          %s270 = smul.u32 4, %s18
          %s272 = ssub.s32 1024, 1024
          %273 = vsyncadd %s263, %s272
          %s274 = smul.addr %s270, 2
          %s275 = smul.addr %s274, 128
          %s276 = scalar_lea.hbm %s1, %s275
          %s277 = sshll.u32 %s266, 4
          %s278 = int_to_ptr.vmem [resolvable:$true] %s277
          %283 = dma.vmem_to_hbm [thread:$0]  %s278, 1024, %s276, %s263, 256, 256, 16
        $region32: #{tpu_custom_call.1} parent=23 // pred_fallthru
          _
      $region24: #{tpu_custom_call.1} parent=5 // pred_fallthru
        _
      %p284 = scmp.le.s32.totalorder 2, %s13
      // Predicated region
      $region33: #{tpu_custom_call.1} parent=5 // pred_check
        %p285 = pneg %p284
      $region34: #{tpu_custom_call.1} parent=5 // pred_check_branch
        %287 = sbr.rel (%p285) target = $region36
      $region35: #{tpu_custom_call.1} parent=5 // pred_region
        %s288 = ssub.s32 %s13, 2
        // Predicated region
        $region37: #{tpu_custom_call.1} parent=35 // pred_check
          %p289 = pneg %p68
        $region38: #{tpu_custom_call.1} parent=35 // pred_check_branch
          %291 = sbr.rel (%p289) target = $region40
        $region39: #{tpu_custom_call.1} parent=35 // pred_region
          %s292 = sand.u32 %s53, 1
          %s293 = scalar_lea.sflag [#allocation4], %s292
          %s294 = sand.u32 %s53, 1
          %s295 = smul.addr %s294, 64
          %s296 = scalar_lea.vmem [#allocation5], %s295
          %297 = dma.done %s293, 1024
        $region40: #{tpu_custom_call.1} parent=35 // pred_fallthru
          _
      $region36: #{tpu_custom_call.1} parent=5 // pred_fallthru
        _
    $region6: #{tpu_custom_call.1} parent=1 // loop_footer
      %s17 = sadd.s32 1, %s13
    $region7: #{tpu_custom_call.1} parent=1 // loop_footer_branch
      %12 = sbr.rel target = $region3
    $region8: #{tpu_custom_call.1} parent=1 // loop_exit
      _
    %298 = vsyncpa [#allocation3], 1
    %s299 = scalar_lea.sflag [#allocation3], 1
    %300 = vsyncpa %s299, 1
    %301 = vsyncpa [#allocation4], 1
    %s302 = scalar_lea.sflag [#allocation4], 1
    %303 = vsyncpa %s302, 1

</llo_original>
